<compile_context>
chip_gen: v5e
topology: v5e:2x2
jax: 0.10.0
libtpu: 0.0.40
codegen_flags: <defaults>
</compile_context>

<pallas_src>
import jax
import jax.numpy as jnp
from jax.experimental import pallas as pl
from jax.experimental.pallas import tpu as pltpu

EPS = 1e-8


def _round_up(x: int, m: int) -> int:
    return (x + m - 1) // m * m


def _cdiv(a: int, b: int) -> int:
    return -(-a // b)


def _device_kind() -> str:
    try:
        return jax.devices()[0].device_kind.lower()
    except Exception:
        return ""


def _generation_config(kind: str):
    """Returns (per-input block bytes, vmem_limit_bytes, tensorcores per chip)."""
    if "v7" in kind:
        # 64 MiB VMEM/TC, ~3.2 TB/s HBM: 2 inputs x 2 buffers x 8 MiB = 32 MiB.
        return 8 << 20, 48 << 20, 2
    if "v6" in kind:
        # 128 MiB physical VMEM, 32 MiB default scoped limit -> raise it.
        return 8 << 20, 64 << 20, 1
    # v5e and unknown chips: 16 MiB default scoped limit -> raise it, keep
    # conservative 4 MiB blocks (16 MiB of input double-buffering).
    return 4 << 20, 64 << 20, 1


def _make_kernel(batch: int, tiles_per_core: int, tile_rows: int,
                 inv_b: float, eps: float):
    eps_sq = eps * eps

    def kernel(x0_ref, x1_ref, o_ref, acc_ref):
        c = pl.program_id(0)
        j = pl.program_id(1)

        @pl.when(j == 0)
        def _():
            acc_ref[...] = jnp.zeros_like(acc_ref)

        x0 = x0_ref[...].astype(jnp.float32)
        x1 = x1_ref[...].astype(jnp.float32)

        dot = jnp.sum(x0 * x1, axis=1, keepdims=True)   # (TB, 1)
        ss0 = jnp.sum(x0 * x0, axis=1, keepdims=True)   # (TB, 1)
        ss1 = jnp.sum(x1 * x1, axis=1, keepdims=True)   # (TB, 1)
        # TODO(synk): if a v7x bundle dump shows VALU saturation on the bf16
        # path, offload these D-reductions to the MXU (dot against a ones
        # vector); HBM binds first on v5e/v6e so it is not done here.

        # cos = dot / (max(||x0||, eps) * max(||x1||, eps))  -- PyTorch
        # per-norm clamp semantics; two EUP rsqrts, no overflow from ss0*ss1.
        cos = (dot
               * jax.lax.rsqrt(jnp.maximum(ss0, eps_sq))
               * jax.lax.rsqrt(jnp.maximum(ss1, eps_sq)))

        # Mask rows past the true batch: ragged last tile, or a fully-dead
        # clamped tile.  jnp.where also squashes any NaN/Inf coming from the
        # unspecified out-of-bounds data Pallas reads for partial blocks.
        tile = c * tiles_per_core + j
        row = tile * tile_rows + jax.lax.broadcasted_iota(
            jnp.int32, (tile_rows, 1), 0)
        cos = jnp.where(row < batch, cos, 0.0)

        # Per-row running sums: pure VPU adds, no per-step XLU reduce.
        acc_ref[...] += cos

        @pl.when(j == tiles_per_core - 1)
        def _():
            # Partial of the final loss for this batch shard: -(sum cos) / B.
            o_ref[0] = -inv_b * jnp.sum(acc_ref[...], axis=0, keepdims=True)

    return kernel


def negative_cosine_similarity(x0: jax.Array, x1: jax.Array, *,
                               eps: float = EPS,
                               max_block_rows=None,
                               core_chunks=None) -> jax.Array:
    """-mean(cosine_similarity(x0, x1, dim=1, eps)) for (B, D) inputs."""
    assert x0.shape == x1.shape and x0.ndim == 2, "expects (B, D) inputs"
    B, D = x0.shape

    kind = _device_kind()
    block_bytes, vmem_limit, n_tc = _generation_config(kind)

    itemsize = max(jnp.dtype(x0.dtype).itemsize, jnp.dtype(x1.dtype).itemsize)
    rows_budget = max(8, (block_bytes // (D * itemsize)) // 8 * 8)
    if max_block_rows is not None:
        rows_budget = max(8, min(rows_budget, (max_block_rows // 8) * 8))
    TB = min(_round_up(B, 8), rows_budget)

    num_tiles = _cdiv(B, TB)
    if core_chunks is not None:
        nc = core_chunks                      # explicit override (testing)
        use_core_parallel = False
    else:
        nc = n_tc if num_tiles >= n_tc else 1
        use_core_parallel = (nc == 2)
    tiles_per_core = _cdiv(num_tiles, nc)
    last_tile = num_tiles - 1

    kernel = _make_kernel(batch=B, tiles_per_core=tiles_per_core,
                          tile_rows=TB, inv_b=1.0 / B, eps=float(eps))

    def in_map(c, j):
        # Clamp so an out-of-range step (odd tile count split over 2 cores)
        # just re-reads the last in-bounds tile; its rows are fully masked
        # in-kernel, and it overlaps the other core's work, so ~no wall cost.
        return (jnp.minimum(c * tiles_per_core + j, last_tile), 0)

    # On v7x, CORE_PARALLEL shards the leading axis across the 2 TensorCores.
    # TODO(synk): if CORE_PARALLEL lowering regresses on some Mosaic versions,
    # fall back to pltpu.PARALLEL (the grid then runs serially on one TC).
    par = (getattr(pltpu, "CORE_PARALLEL", pltpu.PARALLEL)
           if use_core_parallel else pltpu.PARALLEL)

    partials = pl.pallas_call(
        kernel,
        out_shape=jax.ShapeDtypeStruct((nc, 1, 1), jnp.float32),
        grid_spec=pltpu.PrefetchScalarGridSpec(
            num_scalar_prefetch=0,
            grid=(nc, tiles_per_core),
            in_specs=[
                pl.BlockSpec((TB, D), in_map),
                pl.BlockSpec((TB, D), in_map),
            ],
            out_specs=pl.BlockSpec((1, 1, 1), lambda c, j: (c, 0, 0)),
            scratch_shapes=[pltpu.VMEM((TB, 1), jnp.float32)],
        ),
        compiler_params=pltpu.CompilerParams(
            dimension_semantics=(par, pltpu.ARBITRARY),
            vmem_limit_bytes=vmem_limit,
        ),
        cost_estimate=pl.CostEstimate(
            flops=6 * B * D,
            transcendentals=2 * B,
            bytes_accessed=(x0.size * jnp.dtype(x0.dtype).itemsize
                            + x1.size * jnp.dtype(x1.dtype).itemsize
                            + nc * 4),
        ),
    )(x0, x1)

    return jnp.sum(partials)


def _reference(x0, x1, eps=EPS):
    x0 = x0.astype(jnp.float32)
    x1 = x1.astype(jnp.float32)
    dot = jnp.sum(x0 * x1, axis=1)
    n0 = jnp.linalg.norm(x0, axis=1)
    n1 = jnp.linalg.norm(x1, axis=1)
    cos = dot / (jnp.maximum(n0, eps) * jnp.maximum(n1, eps))
    return -jnp.mean(cos)


if __name__ == "__main__":
    key = jax.random.PRNGKey(0)
    k0, k1, k2, k3 = jax.random.split(key, 4)

    # 1) SimSiam docstring shape (B=10, D=128): single tile, in-kernel row
    #    masking handles the ragged (non multiple-of-8) batch.
    x0 = jax.random.normal(k0, (10, 128), dtype=jnp.float32)
    x1 = jax.random.normal(k1, (10, 128), dtype=jnp.float32)
    loss = negative_cosine_similarity(x0, x1)
    jax.block_until_ready(loss)
    ref = _reference(x0, x1)
    assert jnp.allclose(loss, ref, atol=1e-5, rtol=1e-5), (loss, ref)

    # 2) Multi-tile + ragged-last-tile + clamped-dead-tile path:
    #    B=20, 8-row tiles -> 3 tiles split over 2 core-chunks -> grid (2, 2)
    #    with one fully-masked clamped tile.
    y0 = jax.random.normal(k2, (20, 128), dtype=jnp.float32)
    y1 = jax.random.normal(k3, (20, 128), dtype=jnp.float32)
    loss2 = negative_cosine_similarity(y0, y1, max_block_rows=8, core_chunks=2)
    jax.block_until_ready(loss2)
    ref2 = _reference(y0, y1)
    assert jnp.allclose(loss2, ref2, atol=1e-5, rtol=1e-5), (loss2, ref2)

    # 3) bf16 inputs stream at half the HBM traffic; math stays f32 in-kernel.
    z0 = x0.astype(jnp.bfloat16)
    z1 = x1.astype(jnp.bfloat16)
    loss3 = negative_cosine_similarity(z0, z1)
    jax.block_until_ready(loss3)
    ref3 = _reference(z0, z1)
    assert jnp.allclose(loss3, ref3, atol=1e-3, rtol=1e-3), (loss3, ref3)

    print("KERNEL_OK")
</pallas_src>

<mosaic_0001>
module attributes {stable_mosaic.version = 11 : i64} {
  func.func @kernel(%arg0: i32, %arg1: i32, %arg2: memref<16x128xf32, #tpu.memory_space<vmem>>, %arg3: memref<16x128xf32, #tpu.memory_space<vmem>>, %arg4: memref<1x1x1xf32, #tpu.memory_space<vmem>>, %arg5: memref<16x1xf32, #tpu.memory_space<vmem>>) attributes {dimension_semantics = [#tpu.dimension_semantics<parallel>, #tpu.dimension_semantics<arbitrary>], iteration_bounds = array<i64: 1, 1>, scalar_prefetch = 0 : i64, scratch_operands = 1 : i64, tpu.core_type = #tpu.core_type<tc>, window_params = [{transform_indices = @transform_0, window_bounds = array<i64: 16, 128>}, {transform_indices = @transform_1, window_bounds = array<i64: 16, 128>}, {transform_indices = @transform_2, window_bounds = array<i64: 1, 1, 1>}]} {
    %c0_i32 = arith.constant 0 : i32
    %0 = arith.cmpi eq, %arg1, %c0_i32 : i32
    %1 = arith.extui %0 : i1 to i32
    %c0_i32_0 = arith.constant 0 : i32
    %2 = arith.cmpi ne, %1, %c0_i32_0 : i32
    scf.if %2 {
      %cst_15 = arith.constant 0.000000e+00 : f32
      %38 = vector.broadcast %cst_15 : f32 to vector<16x1xf32>
      %c0_16 = arith.constant 0 : index
      %c0_17 = arith.constant 0 : index
      %39 = vector.load %arg5[%c0_16, %c0_17] : memref<16x1xf32, #tpu.memory_space<vmem>>, vector<16x1xf32>
      tpu.vector_store %arg5[%c0_16, %c0_17], %38 {strides = array<i32>} : memref<16x1xf32, #tpu.memory_space<vmem>>, vector<16x1xf32>,
    } else {
    }
    %c0 = arith.constant 0 : index
    %c0_1 = arith.constant 0 : index
    %3 = vector.load %arg2[%c0, %c0_1] : memref<16x128xf32, #tpu.memory_space<vmem>>, vector<16x128xf32>
    %c0_2 = arith.constant 0 : index
    %c0_3 = arith.constant 0 : index
    %4 = vector.load %arg3[%c0_2, %c0_3] : memref<16x128xf32, #tpu.memory_space<vmem>>, vector<16x128xf32>
    %5 = arith.mulf %3, %4 : vector<16x128xf32>
    %cst = arith.constant dense<0.000000e+00> : vector<16xf32>
    %6 = vector.multi_reduction <add>, %5, %cst [1] : vector<16x128xf32> to vector<16xf32>
    %7 = vector.shape_cast %6 : vector<16xf32> to vector<16x1xf32>
    %8 = arith.mulf %3, %3 : vector<16x128xf32>
    %cst_4 = arith.constant dense<0.000000e+00> : vector<16xf32>
    %9 = vector.multi_reduction <add>, %8, %cst_4 [1] : vector<16x128xf32> to vector<16xf32>
    %10 = vector.shape_cast %9 : vector<16xf32> to vector<16x1xf32>
    %11 = arith.mulf %4, %4 : vector<16x128xf32>
    %cst_5 = arith.constant dense<0.000000e+00> : vector<16xf32>
    %12 = vector.multi_reduction <add>, %11, %cst_5 [1] : vector<16x128xf32> to vector<16xf32>
    %13 = vector.shape_cast %12 : vector<16xf32> to vector<16x1xf32>
    %cst_6 = arith.constant 1.000000e-16 : f32
    %14 = vector.broadcast %cst_6 : f32 to vector<16x1xf32>
    %15 = arith.maximumf %10, %14 : vector<16x1xf32>
    %16 = math.rsqrt %15 : vector<16x1xf32>
    %17 = arith.mulf %7, %16 : vector<16x1xf32>
    %cst_7 = arith.constant 1.000000e-16 : f32
    %18 = vector.broadcast %cst_7 : f32 to vector<16x1xf32>
    %19 = arith.maximumf %13, %18 : vector<16x1xf32>
    %20 = math.rsqrt %19 : vector<16x1xf32>
    %21 = arith.mulf %17, %20 : vector<16x1xf32>
    %c1_i32 = arith.constant 1 : i32
    %22 = arith.muli %arg0, %c1_i32 : i32
    %23 = arith.addi %22, %arg1 : i32
    %c16_i32 = arith.constant 16 : i32
    %24 = arith.muli %23, %c16_i32 : i32
    %25 = tpu.iota {dimensions = array<i32: 0>} : vector<16x1xi32>
    %26 = vector.broadcast %24 : i32 to vector<16x1xi32>
    %27 = arith.addi %26, %25 : vector<16x1xi32>
    %c10_i32 = arith.constant 10 : i32
    %28 = vector.broadcast %c10_i32 : i32 to vector<16x1xi32>
    %29 = arith.cmpi slt, %27, %28 : vector<16x1xi32>
    %cst_8 = arith.constant 0.000000e+00 : f32
    %30 = vector.broadcast %cst_8 : f32 to vector<16x1xf32>
    %31 = arith.select %29, %21, %30 : vector<16x1xi1>, vector<16x1xf32>
    %c0_9 = arith.constant 0 : index
    %c0_10 = arith.constant 0 : index
    %32 = vector.load %arg5[%c0_9, %c0_10] : memref<16x1xf32, #tpu.memory_space<vmem>>, vector<16x1xf32>
    %33 = arith.addf %32, %31 : vector<16x1xf32>
    %c0_11 = arith.constant 0 : index
    %c0_12 = arith.constant 0 : index
    %34 = vector.load %arg5[%c0_11, %c0_12] : memref<16x1xf32, #tpu.memory_space<vmem>>, vector<16x1xf32>
    tpu.vector_store %arg5[%c0_11, %c0_12], %33 {strides = array<i32>} : memref<16x1xf32, #tpu.memory_space<vmem>>, vector<16x1xf32>,
    %c0_i32_13 = arith.constant 0 : i32
    %35 = arith.cmpi eq, %arg1, %c0_i32_13 : i32
    %36 = arith.extui %35 : i1 to i32
    %c0_i32_14 = arith.constant 0 : i32
    %37 = arith.cmpi ne, %36, %c0_i32_14 : i32
    scf.if %37 {
      %c0_15 = arith.constant 0 : index
      %c0_16 = arith.constant 0 : index
      %38 = vector.load %arg5[%c0_15, %c0_16] : memref<16x1xf32, #tpu.memory_space<vmem>>, vector<16x1xf32>
      %cst_17 = arith.constant dense<0.000000e+00> : vector<1xf32>
      %39 = vector.multi_reduction <add>, %38, %cst_17 [0] : vector<16x1xf32> to vector<1xf32>
      %40 = vector.shape_cast %39 : vector<1xf32> to vector<1x1xf32>
      %cst_18 = arith.constant -1.000000e-01 : f32
      %41 = vector.broadcast %cst_18 : f32 to vector<1x1xf32>
      %42 = arith.mulf %41, %40 : vector<1x1xf32>
      %c0_19 = arith.constant 0 : index
      %c0_20 = arith.constant 0 : index
      %c0_21 = arith.constant 0 : index
      %43 = vector.load %arg4[%c0_19, %c0_20, %c0_21] : memref<1x1x1xf32, #tpu.memory_space<vmem>>, vector<1x1x1xf32>
      %44 = vector.shape_cast %43 : vector<1x1x1xf32> to vector<1x1xf32>
      %45 = vector.shape_cast %42 : vector<1x1xf32> to vector<1x1x1xf32>
      tpu.vector_store %arg4[%c0_19, %c0_20, %c0_21], %45 {strides = array<i32>} : memref<1x1x1xf32, #tpu.memory_space<vmem>>, vector<1x1x1xf32>,
    } else {
    }
    return
  }
  func.func @transform_0(%arg0: i32, %arg1: i32) -> (i32, i32) {
    %c1_i32 = arith.constant 1 : i32
    %0 = arith.muli %arg0, %c1_i32 : i32
    %1 = arith.addi %0, %arg1 : i32
    %c0_i32 = arith.constant 0 : i32
    %2 = arith.minsi %1, %c0_i32 : i32
    %c0_i32_0 = arith.constant 0 : i32
    %c0_i32_1 = arith.constant 0 : i32
    return %2, %c0_i32_0 : i32, i32
  }
  func.func @transform_1(%arg0: i32, %arg1: i32) -> (i32, i32) {
    %c1_i32 = arith.constant 1 : i32
    %0 = arith.muli %arg0, %c1_i32 : i32
    %1 = arith.addi %0, %arg1 : i32
    %c0_i32 = arith.constant 0 : i32
    %2 = arith.minsi %1, %c0_i32 : i32
    %c0_i32_0 = arith.constant 0 : i32
    %c0_i32_1 = arith.constant 0 : i32
    return %2, %c0_i32_0 : i32, i32
  }
  func.func @transform_2(%arg0: i32, %arg1: i32) -> (i32, i32, i32) {
    %c0_i32 = arith.constant 0 : i32
    %c0_i32_0 = arith.constant 0 : i32
    %c0_i32_1 = arith.constant 0 : i32
    return %arg0, %c0_i32, %c0_i32_0 : i32, i32, i32
  }
}

</mosaic_0001>

<llo_original>
// kernel: tpu_custom_call.1
$region0: #{tpu_custom_call.1}
  #allocation0 [shape = 'u32[]', space=smem, size = 0x4, offset = 0x4, fixed_abs, tag = 'smem constant byte address 0x4 - core index']
  #allocation1 [shape = 'u32[72,128]{1,0:T(1,128)}', space=vmem, size = 0x9000, scoped, tag = 'internal scratch']
  #allocation2 [shape = 'f32[16,1]{1,0:T(8,128)}', space=vmem, size = 0x2000, scoped, tag = 'scratch operand']
  %s0 = inlined_call_operand.hbm [shape: f32[10,128], index: 0, kind: input, shape index: {}]
  %s1 = inlined_call_operand.hbm [shape: f32[10,128], index: 1, kind: input, shape index: {}]
  %s2 = inlined_call_operand.hbm [shape: f32[1,1,1], index: 2, kind: output, shape index: {}]
  %s3 = sld [smem:[#allocation0]]
  $region34: #{tpu_custom_call.1} parent=0
    _
  %s5 = ssub.s32 1, %s3
  %s6 = scalar_select 0, %s5, %s3
  $region1: #{tpu_custom_call.1} parent=0
    #allocation3 [shape = 'u8[8192]{0}', space=vmem, size = 0x2000, scoped, tag = 'input window, operand 0, single buffered']
    #allocation4 [shape = 's32[1]{0}', space=sflag, size = 0x4, scoped, tag = 'scoped memory for tpu_custom_call.1']
    #allocation5 [shape = 's32[1]{0}', space=sflag, size = 0x4, scoped, tag = 'scoped memory for tpu_custom_call.1']
    #allocation6 [shape = 'u8[8192]{0}', space=vmem, size = 0x2000, scoped, tag = 'input window, operand 1, single buffered']
    #allocation7 [shape = 's32[1]{0}', space=sflag, size = 0x4, scoped, tag = 'scoped memory for tpu_custom_call.1']
    #allocation8 [shape = 'u8[512]{0}', space=vmem, size = 0x400, scoped, tag = 'output window, operand 0, single buffered']
    %7 = vsyncpa [#allocation4], 0
    %8 = vsyncpa [#allocation7], 0
    %9 = vsyncpa [#allocation5], 0
    // Predicated region
    $region2: #{tpu_custom_call.1} parent=1 // pred_check
      _
    $region3: #{tpu_custom_call.1} parent=1 // pred_check_branch
      %11 = sbr.rel (0) target = $region5
    $region4: #{tpu_custom_call.1} parent=1 // pred_region
      %s12 = sadd.s32 0, 0
      %p13 = scmp.lt.s32.totalorder %s12, 0
      %s14 = scalar_select %p13, %s12, 0
      %s15 = smul.u32 2, %s14
      %17 = vsyncadd [#allocation4], 0
      %s18 = smul.addr %s15, 8
      %s19 = scalar_lea.hbm %s0, %s18
      %s20 = sshll.u32 %s19, 4
      %s21 = int_to_ptr.hbm [resolvable:$true] %s20
      %s22 = sshll.u32 [#allocation3], 4
      %s23 = int_to_ptr.vmem [resolvable:$true] %s22
      %28 = dma.hbm_to_vmem [thread:$0]  %s21, 256, %s23, [#allocation4], 128, 128, 8
    $region5: #{tpu_custom_call.1} parent=1 // pred_fallthru
      _
    // Predicated region
    $region6: #{tpu_custom_call.1} parent=1 // pred_check
      _
    $region7: #{tpu_custom_call.1} parent=1 // pred_check_branch
      %30 = sbr.rel (0) target = $region9
    $region8: #{tpu_custom_call.1} parent=1 // pred_region
      %s31 = sadd.s32 0, 0
      %p32 = scmp.lt.s32.totalorder %s31, 0
      %s33 = scalar_select %p32, %s31, 0
      %s34 = smul.u32 2, %s33
      %36 = vsyncadd [#allocation7], 0
      %s37 = smul.addr %s34, 8
      %s38 = scalar_lea.hbm %s1, %s37
      %s39 = sshll.u32 %s38, 4
      %s40 = int_to_ptr.hbm [resolvable:$true] %s39
      %s41 = sshll.u32 [#allocation6], 4
      %s42 = int_to_ptr.vmem [resolvable:$true] %s41
      %47 = dma.hbm_to_vmem [thread:$0]  %s40, 256, %s42, [#allocation7], 128, 128, 8
    $region9: #{tpu_custom_call.1} parent=1 // pred_fallthru
      _
    // Predicated region
    $region10: #{tpu_custom_call.1} parent=1 // pred_check
      _
    $region11: #{tpu_custom_call.1} parent=1 // pred_check_branch
      %49 = sbr.rel (0) target = $region13
    $region12: #{tpu_custom_call.1} parent=1 // pred_region
      %51 = dma.done [#allocation4], 256
    $region13: #{tpu_custom_call.1} parent=1 // pred_fallthru
      _
    // Predicated region
    $region14: #{tpu_custom_call.1} parent=1 // pred_check
      _
    $region15: #{tpu_custom_call.1} parent=1 // pred_check_branch
      %53 = sbr.rel (0) target = $region17
    $region16: #{tpu_custom_call.1} parent=1 // pred_region
      %55 = dma.done [#allocation7], 256
    $region17: #{tpu_custom_call.1} parent=1 // pred_fallthru
      _
    %s56 = sadd.s32 0, 0
    %p57 = scmp.lt.s32.totalorder %s56, 0
    %s58 = scalar_select %p57, %s56, 0
    %s59 = smul.u32 2, %s58
    %s60 = sadd.s32 0, 0
    %p61 = scmp.lt.s32.totalorder %s60, 0
    %s62 = scalar_select %p61, %s60, 0
    %s63 = smul.u32 2, %s62
    %p64 = scmp.eq.s32.totalorder 0, 0
    // Predicated region
    $region18: #{tpu_custom_call.1} parent=1 // pred_check
      %p65 = pneg %p64
    $region19: #{tpu_custom_call.1} parent=1 // pred_check_branch
      %67 = sbr.rel (%p65) target = $region21
    $region20: #{tpu_custom_call.1} parent=1 // pred_region
      %vm68 = vcmask 7168
      %69 = vst.msk [vmem:[#allocation2] sm:$0xff] %vm68, 0.0
      %70 = vst.msk [vmem:[#allocation2 + $0x8] sm:$0xff] %vm68, 0.0
    $region21: #{tpu_custom_call.1} parent=1 // pred_fallthru
      _
    %v71 = vld [vmem:[#allocation3] sm:$0xff]
    %v72 = vld [vmem:[#allocation3 + $0x8] sm:$0xff]
    %v73 = vld [vmem:[#allocation6] sm:$0xff]
    %v74 = vld [vmem:[#allocation6 + $0x8] sm:$0xff]
    %v75 = vmul.f32 %v71, %v73
    %v76 = vmul.f32 %v72, %v74
    %77 = vadd.xlane.f32.xlu0 %v75
    %v78 = vpop.xlane.xlu0 %77
    %79 = vadd.xlane.f32.xlu0 %v76
    %v80 = vpop.xlane.xlu0 %79
    %v81 = vmul.f32 %v71, %v71
    %v82 = vmul.f32 %v72, %v72
    %83 = vadd.xlane.f32.xlu0 %v81
    %v84 = vpop.xlane.xlu0 %83
    %85 = vadd.xlane.f32.xlu0 %v82
    %v86 = vpop.xlane.xlu0 %85
    %v87 = vmul.f32 %v73, %v73
    %v88 = vmul.f32 %v74, %v74
    %89 = vadd.xlane.f32.xlu0 %v87
    %v90 = vpop.xlane.xlu0 %89
    %91 = vadd.xlane.f32.xlu0 %v88
    %v92 = vpop.xlane.xlu0 %91
    %v93 = vmax.f32 %v84, 1e-16
    %v94 = vmax.f32 %v86, 1e-16
    %v95 = vrsqrt.pop %v93
    %v96 = vmul.f32 %v95, %v93
    %v97 = vmul.f32 %v96, %v95
    %v98 = vmul.f32 0.5, %v97
    %v99 = vsub.f32 1.5, %v98
    %v100 = vmul.f32 %v95, %v99
    %vm101 = vweird.f32 %v93
    %vm102 = vweird.f32 %v95
    %vm103 = vmor %vm101, %vm102
    %v104 = vsel %vm103, %v95, %v100
    %v105 = vrsqrt.pop %v94
    %v106 = vmul.f32 %v105, %v94
    %v107 = vmul.f32 %v106, %v105
    %v108 = vmul.f32 0.5, %v107
    %v109 = vsub.f32 1.5, %v108
    %v110 = vmul.f32 %v105, %v109
    %vm111 = vweird.f32 %v94
    %vm112 = vweird.f32 %v105
    %vm113 = vmor %vm111, %vm112
    %v114 = vsel %vm113, %v105, %v110
    %v115 = vmul.f32 %v78, %v104
    %v116 = vmul.f32 %v80, %v114
    %v117 = vmax.f32 %v90, 1e-16
    %v118 = vmax.f32 %v92, 1e-16
    %v119 = vrsqrt.pop %v117
    %v120 = vmul.f32 %v119, %v117
    %v121 = vmul.f32 %v120, %v119
    %v122 = vmul.f32 0.5, %v121
    %v123 = vsub.f32 1.5, %v122
    %v124 = vmul.f32 %v119, %v123
    %vm125 = vweird.f32 %v117
    %vm126 = vweird.f32 %v119
    %vm127 = vmor %vm125, %vm126
    %v128 = vsel %vm127, %v119, %v124
    %v129 = vrsqrt.pop %v118
    %v130 = vmul.f32 %v129, %v118
    %v131 = vmul.f32 %v130, %v129
    %v132 = vmul.f32 0.5, %v131
    %v133 = vsub.f32 1.5, %v132
    %v134 = vmul.f32 %v129, %v133
    %vm135 = vweird.f32 %v118
    %vm136 = vweird.f32 %v129
    %vm137 = vmor %vm135, %vm136
    %v138 = vsel %vm137, %v129, %v134
    %v139 = vmul.f32 %v115, %v128
    %v140 = vmul.f32 %v116, %v138
    %s141 = sadd.s32 0, 0
    %s142 = smul.u32 %s141, 16
    %v143 = vlaneseq
    %v144 = vshrl.u32 %v143, 7
    %v145 = vadd.s32 %v144, 8
    %v146 = vstv %s142
    %v147 = vadd.s32 %v146, %v144
    %v148 = vadd.s32 %v146, %v145
    %vm149 = vcmp.lt.s32.totalorder %v147, 10
    %vm150 = vcmp.lt.s32.totalorder %v148, 10
    %v151 = vsel %vm149, %v139, 0.0
    %v152 = vsel %vm150, %v140, 0.0
    %v153 = vld [vmem:[#allocation2] sm:$0xff]
    %v154 = vld [vmem:[#allocation2 + $0x8] sm:$0xff]
    %v155 = vadd.f32 %v153, %v151
    %v156 = vadd.f32 %v154, %v152
    %vm157 = vcmask 7168
    %158 = vst.msk [vmem:[#allocation2] sm:$0xff] %vm157, %v155
    %159 = vst.msk [vmem:[#allocation2 + $0x8] sm:$0xff] %vm157, %v156
    // Predicated region
    $region22: #{tpu_custom_call.1} parent=1 // pred_check
      %p160 = pneg %p64
    $region23: #{tpu_custom_call.1} parent=1 // pred_check_branch
      %162 = sbr.rel (%p160) target = $region25
    $region24: #{tpu_custom_call.1} parent=1 // pred_region
      %v163 = vld [vmem:[#allocation2] sm:$0xff]
      %v164 = vld [vmem:[#allocation2 + $0x8] sm:$0xff]
      %v165 = vsel %vm157, %v163, 0.0
      %v166 = vsel %vm157, %v164, 0.0
      %v167 = vadd.f32 %v165, %v166
      %v168 = vrot.slane %v167, 4
      %v169 = vadd.f32 %v167, %v168
      %v170 = vrot.slane %v169, 2
      %v171 = vadd.f32 %v169, %v170
      %v172 = vrot.slane %v171, 1
      %v173 = vadd.f32 %v171, %v172
      %v174 = vmul.f32 %v173, -0.1
      %vm175 = vcmask 0
      %176 = vst.msk [vmem:[#allocation8] sm:$0x1] %vm175, %v174
    $region25: #{tpu_custom_call.1} parent=1 // pred_fallthru
      _
    // Predicated region
    $region26: #{tpu_custom_call.1} parent=1 // pred_check
      _
    $region27: #{tpu_custom_call.1} parent=1 // pred_check_branch
      %178 = sbr.rel (0) target = $region29
    $region28: #{tpu_custom_call.1} parent=1 // pred_region
      %180 = vsyncadd [#allocation5], 0
      %s182 = sshll.u32 [#allocation8], 4
      %s183 = int_to_ptr.vmem [resolvable:$true] %s182
      %s184 = sshll.u32 %s2, 4
      %s185 = int_to_ptr.hbm [resolvable:$true] %s184
      %187 = dma.vmem_to_hbm [thread:$0]  %s183, 16, %s185, [#allocation5]
    $region29: #{tpu_custom_call.1} parent=1 // pred_fallthru
      _
    // Predicated region
    $region30: #{tpu_custom_call.1} parent=1 // pred_check
      _
    $region31: #{tpu_custom_call.1} parent=1 // pred_check_branch
      %189 = sbr.rel (0) target = $region33
    $region32: #{tpu_custom_call.1} parent=1 // pred_region
      %191 = dma.done [#allocation5], 16
    $region33: #{tpu_custom_call.1} parent=1 // pred_fallthru
      _
    %192 = vsyncpa [#allocation4], 1
    %193 = vsyncpa [#allocation7], 1
    %194 = vsyncpa [#allocation5], 1

</llo_original>
